<compile_context>
chip_gen: v7x
topology: tpu7x:2x2x1
jax: 0.10.0
libtpu: 0.0.40
codegen_flags: <defaults>
</compile_context>

<pallas_src>
import jax
import jax.numpy as jnp
from jax.experimental import pallas as pl
from jax.experimental.pallas import tpu as pltpu


def _down_kernel(x_ref, m1_ref, b1_ref, m2_ref, b2_ref, o_ref):
    """Fused forward for Nb batch elements.

    x_ref  : (Nb, 2, Hp, W*Cin)  f32   pooled row pair on its own axis
    m1_ref : (3*W*Cin,  W*Cout)  bf16  K-concatenated banded conv1 weights (BN1 folded)
    m2_ref : (3*W*Cout, W*Cout)  bf16  K-concatenated banded conv2 weights (BN2 folded)
    b*_ref : (1, W*Cout)         f32   BN bias tiled over W
    o_ref  : (Nb, Hp, W*Cout)    f32   lane-dense output
    """
    x = x_ref[...]                                       # (Nb, 2, Hp, W*Cin)
    xp = jnp.maximum(x[:, 0], x[:, 1])                   # max_pool2d (2,1): aligned VPU max

    def conv3x3_bn_relu(a, m_ref, b_ref):
        # a: (Nb, Hp, W*C) f32.  Build the K-concatenated dy-shifted slab and
        # run ONE bf16 MXU dot; H padding = zero rows, batch boundaries are
        # respected because shifts are per batch element (axis 1).
        nb_, hp_, wc = a.shape
        a16 = a.astype(jnp.bfloat16)
        zrow = jnp.zeros((nb_, 1, wc), jnp.bfloat16)
        up = jnp.concatenate([zrow, a16[:, :-1, :]], axis=1)   # output row y reads y-1
        dn = jnp.concatenate([a16[:, 1:, :], zrow], axis=1)    # output row y reads y+1
        k = jnp.concatenate([up, a16, dn], axis=-1)            # (Nb, Hp, 3*W*C)
        k = k.reshape(nb_ * hp_, 3 * wc)                       # M = Nb*Hp rows
        acc = jnp.dot(k, m_ref[...],                           # single MXU matmul
                      preferred_element_type=jnp.float32)
        acc = jnp.maximum(acc + b_ref[...], 0.0)               # BN bias + ReLU (f32 VPU)
        return acc.reshape(nb_, hp_, m_ref.shape[1])

    h1 = conv3x3_bn_relu(xp, m1_ref, b1_ref)              # (Nb, Hp, W*Cout)
    h2 = conv3x3_bn_relu(h1, m2_ref, b2_ref)              # (Nb, Hp, W*Cout)
    o_ref[...] = h2                                       # lane-dense 128-wide store


def _band_weights(w_hwio, W):
    """HWIO (3,3,Cin,Cout) -> banded (3, W*Cin, W*Cout): dx taps + W-boundary padding."""
    kH, kW, Cin, Cout = w_hwio.shape
    xcol = jnp.arange(W)[:, None]              # input column
    xo = jnp.arange(W)[None, :]                # output column
    dx = xcol - xo + (kW // 2)                 # tap index
    valid = (dx >= 0) & (dx < kW)
    dx_c = jnp.clip(dx, 0, kW - 1)
    taps = w_hwio[:, dx_c, :, :]               # (kH, W, W, Cin, Cout)
    taps = jnp.where(valid[None, :, :, None, None], taps, 0.0)
    # -> (kH, x, ci, xo, co) -> (kH, W*Cin, W*Cout)
    return jnp.transpose(taps, (0, 1, 3, 2, 4)).reshape(kH, W * Cin, W * Cout)


def prepare_down_params(w1, s1, b1, w2, s2, b2, W):
    """Build banded bf16 weights (BN scale folded) + f32 tiled biases.  Run ONCE."""
    Cin, Cout = w1.shape[2], w1.shape[3]
    m1 = (_band_weights(w1, W) * jnp.tile(s1, (W,))[None, None, :]) \
        .reshape(3 * W * Cin, W * Cout).astype(jnp.bfloat16)
    m2 = (_band_weights(w2, W) * jnp.tile(s2, (W,))[None, None, :]) \
        .reshape(3 * W * Cout, W * Cout).astype(jnp.bfloat16)
    b1t = jnp.tile(b1, (W,)).reshape(1, W * Cout).astype(jnp.float32)
    b2t = jnp.tile(b2, (W,)).reshape(1, W * Cout).astype(jnp.float32)
    return m1, b1t, m2, b2t


def _pick_block_batch(n, hp):
    """Largest divisor of n with Nb*Hp <~ 256 MXU rows; keep >=2 grid steps when
    n > 1 so both v7x TensorCores get work (extra tiny step is noise on 1-TC chips)."""
    target = max(1, 256 // max(hp, 1))
    cap = target if n == 1 else min(target, max(1, n // 2))
    nb = 1
    for d in range(1, n + 1):
        if n % d == 0 and d <= cap:
            nb = d
    return nb


def down_forward(x_nhwc, m1, b1t, m2, b2t):
    """x_nhwc: (N, H, W, Cin) f32; m*/b* from prepare_down_params.
    Returns (N, H//2, W, Cout) f32."""
    N, H, W, Cin = x_nhwc.shape
    WCin = W * Cin
    WCout = m1.shape[1]
    Cout = WCout // W
    Hp = H // 2                                # PyTorch max_pool2d floor-divides H
    nb = _pick_block_batch(N, Hp)

    # Pooled row pair on its own axis -> aligned VPU max in-kernel.
    x_fused = (x_nhwc[:, : 2 * Hp]
               .reshape(N, Hp, 2, WCin)
               .transpose(0, 2, 1, 3))         # (N, 2, Hp, W*Cin)

    out_fused = pl.pallas_call(
        _down_kernel,
        out_shape=jax.ShapeDtypeStruct((N, Hp, WCout), jnp.float32),
        grid_spec=pltpu.PrefetchScalarGridSpec(
            num_scalar_prefetch=0,
            grid=(N // nb,),
            in_specs=[
                pl.BlockSpec((nb, 2, Hp, WCin), lambda i: (i, 0, 0, 0)),
                # Weight/bias blocks are grid-constant (index_map -> 0).
                pl.BlockSpec((3 * WCin, WCout), lambda i: (0, 0)),
                pl.BlockSpec((1, WCout), lambda i: (0, 0)),
                pl.BlockSpec((3 * WCout, WCout), lambda i: (0, 0)),
                pl.BlockSpec((1, WCout), lambda i: (0, 0)),
            ],
            out_specs=pl.BlockSpec((nb, Hp, WCout), lambda i: (i, 0, 0)),
        ),
        compiler_params=pltpu.CompilerParams(
            dimension_semantics=("parallel",)),
    )(x_fused, m1, b1t, m2, b2t)

    return out_fused.reshape(N, Hp, W, Cout)


def _reference(x, w1, s1, b1, w2, s2, b2):
    """Pure-JAX reference of Down.forward (NHWC), with MXU-operand bf16
    quantization mirrored so the check stays tight."""
    Hp = x.shape[1] // 2
    x = x[:, : 2 * Hp]
    xp = jnp.maximum(x[:, 0::2, :, :], x[:, 1::2, :, :])        # max_pool2d (2,1)
    dn = ("NHWC", "HWIO", "NHWC")

    def q(v):  # bf16 operand quantization (matches kernel's MXU inputs)
        return v.astype(jnp.bfloat16).astype(jnp.float32)

    w1f = q(w1 * s1)                                            # BN1 scale folded
    w2f = q(w2 * s2)                                            # BN2 scale folded
    y = jax.lax.conv_general_dilated(q(xp), w1f, (1, 1), "SAME",
                                     dimension_numbers=dn,
                                     precision=jax.lax.Precision.HIGHEST)
    y = jnp.maximum(y + b1, 0.0)
    y = jax.lax.conv_general_dilated(q(y), w2f, (1, 1), "SAME",
                                     dimension_numbers=dn,
                                     precision=jax.lax.Precision.HIGHEST)
    y = jnp.maximum(y + b2, 0.0)
    return y


if __name__ == "__main__":
    N, Cin, Cout, H, W = 2, 4, 8, 16, 16
    key = jax.random.PRNGKey(0)
    ks = jax.random.split(key, 11)

    # PyTorch-convention NCHW input, transposed to the kernel's NHWC layout.
    x_nchw = jax.random.normal(ks[0], (N, Cin, H, W), jnp.float32)
    x = jnp.transpose(x_nchw, (0, 2, 3, 1))

    # Conv weights, HWIO (PyTorch stores OIHW; synthetic init, deterministic).
    w1 = 0.2 * jax.random.normal(ks[1], (3, 3, Cin, Cout), jnp.float32)
    w2 = 0.2 * jax.random.normal(ks[2], (3, 3, Cout, Cout), jnp.float32)

    # Eval-mode BatchNorm folded into per-channel scale/bias.
    eps = 1e-5

    def bn_fold(kg, kb, km, kv, C):
        gamma = 1.0 + 0.1 * jax.random.normal(kg, (C,), jnp.float32)
        beta = 0.1 * jax.random.normal(kb, (C,), jnp.float32)
        running_mean = 0.1 * jax.random.normal(km, (C,), jnp.float32)
        running_var = jnp.abs(jax.random.normal(kv, (C,), jnp.float32)) + 0.5
        scale = gamma * jax.lax.rsqrt(running_var + eps)
        bias = beta - running_mean * scale
        return scale, bias

    s1, b1 = bn_fold(ks[3], ks[4], ks[5], ks[6], Cout)
    s2, b2 = bn_fold(ks[7], ks[8], ks[9], ks[10], Cout)

    # Weight prep runs once, outside the forward path.
    params = prepare_down_params(w1, s1, b1, w2, s2, b2, W)
    fwd = jax.jit(down_forward)

    out = jax.block_until_ready(fwd(x, *params))
    ref = jax.block_until_ready(_reference(x, w1, s1, b1, w2, s2, b2))

    assert out.shape == (N, H // 2, W, Cout)
    assert jnp.allclose(out, ref, atol=1e-2, rtol=1e-2), (
        float(jnp.max(jnp.abs(out - ref))))

    # Back to PyTorch's NCHW output convention: (N, Cout, H//2, W).
    out_nchw = jnp.transpose(out, (0, 3, 1, 2))
    assert out_nchw.shape == (N, Cout, H // 2, W)

    print("KERNEL_OK")
</pallas_src>

<mosaic_0001>
module attributes {stable_mosaic.version = 11 : i64} {
  func.func @_down_kernel(%arg0: i32, %arg1: memref<1x2x8x64xf32, #tpu.memory_space<vmem>>, %arg2: memref<192x128xbf16, #tpu.memory_space<vmem>>, %arg3: memref<1x128xf32, #tpu.memory_space<vmem>>, %arg4: memref<384x128xbf16, #tpu.memory_space<vmem>>, %arg5: memref<1x128xf32, #tpu.memory_space<vmem>>, %arg6: memref<1x8x128xf32, #tpu.memory_space<vmem>>) attributes {dimension_semantics = [#tpu.dimension_semantics<parallel>], iteration_bounds = array<i64: 2>, scalar_prefetch = 0 : i64, scratch_operands = 0 : i64, tpu.core_type = #tpu.core_type<tc>, window_params = [{transform_indices = @transform_0, window_bounds = array<i64: 1, 2, 8, 64>}, {pipeline_mode = #tpu.pipeline_mode<synchronous>, transform_indices = @transform_1, window_bounds = array<i64: 192, 128>}, {pipeline_mode = #tpu.pipeline_mode<synchronous>, transform_indices = @transform_2, window_bounds = array<i64: 1, 128>}, {pipeline_mode = #tpu.pipeline_mode<synchronous>, transform_indices = @transform_3, window_bounds = array<i64: 384, 128>}, {pipeline_mode = #tpu.pipeline_mode<synchronous>, transform_indices = @transform_4, window_bounds = array<i64: 1, 128>}, {transform_indices = @transform_5, window_bounds = array<i64: 1, 8, 128>}]} {
    %c0 = arith.constant 0 : index
    %c0_0 = arith.constant 0 : index
    %c0_1 = arith.constant 0 : index
    %c0_2 = arith.constant 0 : index
    %0 = vector.load %arg1[%c0, %c0_0, %c0_1, %c0_2] : memref<1x2x8x64xf32, #tpu.memory_space<vmem>>, vector<1x2x8x64xf32>
    %1 = vector.extract_strided_slice %0 {offsets = [0, 0, 0, 0], sizes = [1, 1, 8, 64], strides = [1, 1, 1, 1]} : vector<1x2x8x64xf32> to vector<1x1x8x64xf32>
    %2 = vector.shape_cast %1 : vector<1x1x8x64xf32> to vector<1x8x64xf32>
    %3 = vector.extract_strided_slice %0 {offsets = [0, 1, 0, 0], sizes = [1, 1, 8, 64], strides = [1, 1, 1, 1]} : vector<1x2x8x64xf32> to vector<1x1x8x64xf32>
    %4 = vector.shape_cast %3 : vector<1x1x8x64xf32> to vector<1x8x64xf32>
    %5 = arith.maximumf %2, %4 : vector<1x8x64xf32>
    %6 = arith.truncf %5 : vector<1x8x64xf32> to vector<1x8x64xbf16>
    %cst = arith.constant 0.000000e+00 : bf16
    %7 = vector.broadcast %cst : bf16 to vector<1x1x64xbf16>
    %8 = vector.extract_strided_slice %6 {offsets = [0, 0, 0], sizes = [1, 7, 64], strides = [1, 1, 1]} : vector<1x8x64xbf16> to vector<1x7x64xbf16>
    %9 = tpu.concatenate %7, %8 in 1 : vector<1x1x64xbf16>, vector<1x7x64xbf16> -> vector<1x8x64xbf16>
    %10 = vector.extract_strided_slice %6 {offsets = [0, 1, 0], sizes = [1, 7, 64], strides = [1, 1, 1]} : vector<1x8x64xbf16> to vector<1x7x64xbf16>
    %11 = tpu.concatenate %10, %7 in 1 : vector<1x7x64xbf16>, vector<1x1x64xbf16> -> vector<1x8x64xbf16>
    %12 = tpu.concatenate %9, %6, %11 in 2 : vector<1x8x64xbf16>, vector<1x8x64xbf16>, vector<1x8x64xbf16> -> vector<1x8x192xbf16>
    %13 = vector.shape_cast %12 : vector<1x8x192xbf16> to vector<8x192xbf16>
    %c0_3 = arith.constant 0 : index
    %c0_4 = arith.constant 0 : index
    %14 = vector.load %arg2[%c0_3, %c0_4] : memref<192x128xbf16, #tpu.memory_space<vmem>>, vector<192x128xbf16>
    %cst_5 = arith.constant dense<0.000000e+00> : vector<8x128xf32>
    %15 = tpu.matmul %13, %14, %cst_5 {dimension_numbers = #tpu.dot_dimension_numbers<[1], [0], [0], [1], [0, 0, 1, 1], [], []>} : vector<8x192xbf16>, vector<192x128xbf16>, vector<8x128xf32> -> vector<8x128xf32>
    %c0_6 = arith.constant 0 : index
    %c0_7 = arith.constant 0 : index
    %16 = vector.load %arg3[%c0_6, %c0_7] : memref<1x128xf32, #tpu.memory_space<vmem>>, vector<1x128xf32>
    %17 = vector.broadcast %16 : vector<1x128xf32> to vector<8x128xf32>
    %18 = arith.addf %15, %17 : vector<8x128xf32>
    %cst_8 = arith.constant 0.000000e+00 : f32
    %19 = vector.broadcast %cst_8 : f32 to vector<8x128xf32>
    %20 = arith.maximumf %18, %19 : vector<8x128xf32>
    %21 = vector.shape_cast %20 : vector<8x128xf32> to vector<1x8x128xf32>
    %22 = arith.truncf %21 : vector<1x8x128xf32> to vector<1x8x128xbf16>
    %cst_9 = arith.constant 0.000000e+00 : bf16
    %23 = vector.broadcast %cst_9 : bf16 to vector<1x1x128xbf16>
    %24 = vector.extract_strided_slice %22 {offsets = [0, 0, 0], sizes = [1, 7, 128], strides = [1, 1, 1]} : vector<1x8x128xbf16> to vector<1x7x128xbf16>
    %25 = tpu.concatenate %23, %24 in 1 : vector<1x1x128xbf16>, vector<1x7x128xbf16> -> vector<1x8x128xbf16>
    %26 = vector.extract_strided_slice %22 {offsets = [0, 1, 0], sizes = [1, 7, 128], strides = [1, 1, 1]} : vector<1x8x128xbf16> to vector<1x7x128xbf16>
    %27 = tpu.concatenate %26, %23 in 1 : vector<1x7x128xbf16>, vector<1x1x128xbf16> -> vector<1x8x128xbf16>
    %28 = tpu.concatenate %25, %22, %27 in 2 : vector<1x8x128xbf16>, vector<1x8x128xbf16>, vector<1x8x128xbf16> -> vector<1x8x384xbf16>
    %29 = vector.shape_cast %28 : vector<1x8x384xbf16> to vector<8x384xbf16>
    %c0_10 = arith.constant 0 : index
    %c0_11 = arith.constant 0 : index
    %30 = vector.load %arg4[%c0_10, %c0_11] : memref<384x128xbf16, #tpu.memory_space<vmem>>, vector<384x128xbf16>
    %cst_12 = arith.constant dense<0.000000e+00> : vector<8x128xf32>
    %31 = tpu.matmul %29, %30, %cst_12 {dimension_numbers = #tpu.dot_dimension_numbers<[1], [0], [0], [1], [0, 0, 1, 1], [], []>} : vector<8x384xbf16>, vector<384x128xbf16>, vector<8x128xf32> -> vector<8x128xf32>
    %c0_13 = arith.constant 0 : index
    %c0_14 = arith.constant 0 : index
    %32 = vector.load %arg5[%c0_13, %c0_14] : memref<1x128xf32, #tpu.memory_space<vmem>>, vector<1x128xf32>
    %33 = vector.broadcast %32 : vector<1x128xf32> to vector<8x128xf32>
    %34 = arith.addf %31, %33 : vector<8x128xf32>
    %cst_15 = arith.constant 0.000000e+00 : f32
    %35 = vector.broadcast %cst_15 : f32 to vector<8x128xf32>
    %36 = arith.maximumf %34, %35 : vector<8x128xf32>
    %37 = vector.shape_cast %36 : vector<8x128xf32> to vector<1x8x128xf32>
    %c0_16 = arith.constant 0 : index
    %c0_17 = arith.constant 0 : index
    %c0_18 = arith.constant 0 : index
    %38 = vector.load %arg6[%c0_16, %c0_17, %c0_18] : memref<1x8x128xf32, #tpu.memory_space<vmem>>, vector<1x8x128xf32>
    tpu.vector_store %arg6[%c0_16, %c0_17, %c0_18], %37 {strides = array<i32>} : memref<1x8x128xf32, #tpu.memory_space<vmem>>, vector<1x8x128xf32>,
    return
  }
  func.func @transform_0(%arg0: i32) -> (i32, i32, i32, i32) {
    %c0_i32 = arith.constant 0 : i32
    %c0_i32_0 = arith.constant 0 : i32
    %c0_i32_1 = arith.constant 0 : i32
    %c0_i32_2 = arith.constant 0 : i32
    return %arg0, %c0_i32, %c0_i32_0, %c0_i32_1 : i32, i32, i32, i32
  }
  func.func @transform_1(%arg0: i32) -> (i32, i32) {
    %c0_i32 = arith.constant 0 : i32
    %c0_i32_0 = arith.constant 0 : i32
    %c0_i32_1 = arith.constant 0 : i32
    return %c0_i32, %c0_i32_0 : i32, i32
  }
  func.func @transform_2(%arg0: i32) -> (i32, i32) {
    %c0_i32 = arith.constant 0 : i32
    %c0_i32_0 = arith.constant 0 : i32
    %c0_i32_1 = arith.constant 0 : i32
    return %c0_i32, %c0_i32_0 : i32, i32
  }
  func.func @transform_3(%arg0: i32) -> (i32, i32) {
    %c0_i32 = arith.constant 0 : i32
    %c0_i32_0 = arith.constant 0 : i32
    %c0_i32_1 = arith.constant 0 : i32
    return %c0_i32, %c0_i32_0 : i32, i32
  }
  func.func @transform_4(%arg0: i32) -> (i32, i32) {
    %c0_i32 = arith.constant 0 : i32
    %c0_i32_0 = arith.constant 0 : i32
    %c0_i32_1 = arith.constant 0 : i32
    return %c0_i32, %c0_i32_0 : i32, i32
  }
  func.func @transform_5(%arg0: i32) -> (i32, i32, i32) {
    %c0_i32 = arith.constant 0 : i32
    %c0_i32_0 = arith.constant 0 : i32
    %c0_i32_1 = arith.constant 0 : i32
    return %arg0, %c0_i32, %c0_i32_0 : i32, i32, i32
  }
}

</mosaic_0001>

<llo_original>
// kernel: down_forward.1
$region0: #{down_forward.1}
  #allocation0 [shape = 'u32[]', space=smem, size = 0x4, offset = 0x4, fixed_abs, tag = 'smem constant byte address 0x4 - core index']
  #allocation1 [shape = 'u32[144,128]{1,0:T(1,128)}', space=vmem, size = 0x12000, scoped, tag = 'internal scratch']
  %s0 = inlined_call_operand.vmem [shape: f32[2,2,8,64], index: 0, kind: input, shape index: {}]
  %s1 = inlined_call_operand.vmem [shape: bf16[192,128], index: 1, kind: input, shape index: {}]
  %s2 = inlined_call_operand.vmem [shape: f32[1,128], index: 2, kind: input, shape index: {}]
  %s3 = inlined_call_operand.vmem [shape: bf16[384,128], index: 3, kind: input, shape index: {}]
  %s4 = inlined_call_operand.vmem [shape: f32[1,128], index: 4, kind: input, shape index: {}]
  %s5 = inlined_call_operand.vmem [shape: f32[2,8,128], index: 5, kind: output, shape index: {}]
  %s6 = sld [smem:[#allocation0]]
  $region53: #{down_forward.1} parent=0
    _
  %s8 = ssub.s32 1, %s6
  %s9 = scalar_select 0, %s8, %s6
  loop: start=0, step=1, limit=4
  $region2: #{down_forward.1} parent=0 // loop_pre_header
    _
  $region3: #{down_forward.1} parent=0 // loop_header
    %s11 = sphi 0, %s15
    %p12 = scmp.ge.s32.totalorder %s11, 4
    %s21 = sphi 0, %s23
    %s24 = sphi 0, %s21
    %s25 = sphi 0, %s24
    %s41 = sphi 0, %s25
    %s45 = sphi 0, %s45
    %s47 = sphi 0, %s45
    %s48 = sphi 0, %s47
    %s62 = sphi 0, %s48
    %s66 = sphi 0, %s66
    %s68 = sphi 0, %s66
    %s69 = sphi 0, %s68
    %s83 = sphi 0, %s69
    %s87 = sphi 0, %s87
    %s89 = sphi 0, %s87
    %s90 = sphi 0, %s89
    %s104 = sphi 0, %s90
    %s108 = sphi 0, %s108
    %s110 = sphi 0, %s108
    %s111 = sphi 0, %s110
    %s125 = sphi 0, %s111
    %s131 = sphi 0, %s133
    %s134 = sphi 0, %s131
    %s135 = sphi 0, %s134
    %s151 = sphi 0, %s135
  $region4: #{down_forward.1} parent=0 // loop_header_branch
    %14 = sbr.rel (%p12) target = $region8
  $region5: #{down_forward.1} parent=0 // loop_body
    %s16 = ssub.s32 %s11, 1
    %s17 = ssub.s32 %s11, 2
    %s18 = sadd.s32 %s11, 1
    %s19 = ssub.s32 %s11, %s18
    %p20 = scmp.eq.s32.totalorder %s19, 0
    %s22 = sadd.s32 %s21, 1
    %s23 = scalar_select %p20, %s21, %s22
    %p26 = pneg %p20
    %p27 = scmp.eq.s32.totalorder %s11, 1
    %p28 = por %p26, %p27
    %p29 = scmp.ne.s32.totalorder %s21, %s24
    %p30 = scmp.eq.s32.totalorder %s11, 0
    %p31 = por %p29, %p30
    %p32 = scmp.ne.s32.totalorder %s21, %s24
    %p33 = scmp.eq.s32.totalorder %s16, 1
    %p34 = por %p32, %p33
    %p35 = scmp.ne.s32.totalorder %s24, %s25
    %p36 = scmp.eq.s32.totalorder %s16, 0
    %p37 = por %p35, %p36
    %p38 = scmp.ne.s32.totalorder %s24, %s25
    %p39 = scmp.eq.s32.totalorder %s17, 1
    %p40 = por %p38, %p39
    %p42 = scmp.ne.s32.totalorder %s25, %s41
    %p43 = scmp.eq.s32.totalorder %s17, 0
    %p44 = por %p42, %p43
    %s46 = sadd.s32 %s45, 1
    %p49 = scmp.eq.s32.totalorder %s11, 1
    %p50 = scmp.ne.s32.totalorder %s45, %s47
    %p51 = scmp.eq.s32.totalorder %s11, 0
    %p52 = por %p50, %p51
    %p53 = scmp.ne.s32.totalorder %s45, %s47
    %p54 = scmp.eq.s32.totalorder %s16, 1
    %p55 = por %p53, %p54
    %p56 = scmp.ne.s32.totalorder %s47, %s48
    %p57 = scmp.eq.s32.totalorder %s16, 0
    %p58 = por %p56, %p57
    %p59 = scmp.ne.s32.totalorder %s47, %s48
    %p60 = scmp.eq.s32.totalorder %s17, 1
    %p61 = por %p59, %p60
    %p63 = scmp.ne.s32.totalorder %s48, %s62
    %p64 = scmp.eq.s32.totalorder %s17, 0
    %p65 = por %p63, %p64
    %s67 = sadd.s32 %s66, 1
    %p70 = scmp.eq.s32.totalorder %s11, 1
    %p71 = scmp.ne.s32.totalorder %s66, %s68
    %p72 = scmp.eq.s32.totalorder %s11, 0
    %p73 = por %p71, %p72
    %p74 = scmp.ne.s32.totalorder %s66, %s68
    %p75 = scmp.eq.s32.totalorder %s16, 1
    %p76 = por %p74, %p75
    %p77 = scmp.ne.s32.totalorder %s68, %s69
    %p78 = scmp.eq.s32.totalorder %s16, 0
    %p79 = por %p77, %p78
    %p80 = scmp.ne.s32.totalorder %s68, %s69
    %p81 = scmp.eq.s32.totalorder %s17, 1
    %p82 = por %p80, %p81
    %p84 = scmp.ne.s32.totalorder %s69, %s83
    %p85 = scmp.eq.s32.totalorder %s17, 0
    %p86 = por %p84, %p85
    %s88 = sadd.s32 %s87, 1
    %p91 = scmp.eq.s32.totalorder %s11, 1
    %p92 = scmp.ne.s32.totalorder %s87, %s89
    %p93 = scmp.eq.s32.totalorder %s11, 0
    %p94 = por %p92, %p93
    %p95 = scmp.ne.s32.totalorder %s87, %s89
    %p96 = scmp.eq.s32.totalorder %s16, 1
    %p97 = por %p95, %p96
    %p98 = scmp.ne.s32.totalorder %s89, %s90
    %p99 = scmp.eq.s32.totalorder %s16, 0
    %p100 = por %p98, %p99
    %p101 = scmp.ne.s32.totalorder %s89, %s90
    %p102 = scmp.eq.s32.totalorder %s17, 1
    %p103 = por %p101, %p102
    %p105 = scmp.ne.s32.totalorder %s90, %s104
    %p106 = scmp.eq.s32.totalorder %s17, 0
    %p107 = por %p105, %p106
    %s109 = sadd.s32 %s108, 1
    %p112 = scmp.eq.s32.totalorder %s11, 1
    %p113 = scmp.ne.s32.totalorder %s108, %s110
    %p114 = scmp.eq.s32.totalorder %s11, 0
    %p115 = por %p113, %p114
    %p116 = scmp.ne.s32.totalorder %s108, %s110
    %p117 = scmp.eq.s32.totalorder %s16, 1
    %p118 = por %p116, %p117
    %p119 = scmp.ne.s32.totalorder %s110, %s111
    %p120 = scmp.eq.s32.totalorder %s16, 0
    %p121 = por %p119, %p120
    %p122 = scmp.ne.s32.totalorder %s110, %s111
    %p123 = scmp.eq.s32.totalorder %s17, 1
    %p124 = por %p122, %p123
    %p126 = scmp.ne.s32.totalorder %s111, %s125
    %p127 = scmp.eq.s32.totalorder %s17, 0
    %p128 = por %p126, %p127
    %s129 = ssub.s32 %s11, %s18
    %p130 = scmp.eq.s32.totalorder %s129, 0
    %s132 = sadd.s32 %s131, 1
    %s133 = scalar_select %p130, %s131, %s132
    %p136 = pneg %p130
    %p137 = scmp.eq.s32.totalorder %s11, 1
    %p138 = por %p136, %p137
    %p139 = scmp.ne.s32.totalorder %s131, %s134
    %p140 = scmp.eq.s32.totalorder %s11, 0
    %p141 = por %p139, %p140
    %p142 = scmp.ne.s32.totalorder %s131, %s134
    %p143 = scmp.eq.s32.totalorder %s16, 1
    %p144 = por %p142, %p143
    %p145 = scmp.ne.s32.totalorder %s134, %s135
    %p146 = scmp.eq.s32.totalorder %s16, 0
    %p147 = por %p145, %p146
    %p148 = scmp.ne.s32.totalorder %s134, %s135
    %p149 = scmp.eq.s32.totalorder %s17, 1
    %p150 = por %p148, %p149
    %p152 = scmp.ne.s32.totalorder %s135, %s151
    %p153 = scmp.eq.s32.totalorder %s17, 0
    %p154 = por %p152, %p153
    %p155 = scmp.le.s32.totalorder 1, %s11
    %p156 = scmp.lt.s32.totalorder %s11, 3
    %p157 = pnand %p155, %p156
    %p158 = pneg %p157
    // Predicated region
    $region9: #{down_forward.1} parent=5 // pred_check
      _
    $region10: #{down_forward.1} parent=5 // pred_check_branch
      %160 = sbr.rel (%p157) target = $region12
    $region11: #{down_forward.1} parent=5 // pred_region
      %s161 = ssub.s32 %s11, 1
      // Predicated region
      $region13: #{down_forward.1} parent=11 // pred_check
        %p162 = pneg %p58
      $region14: #{down_forward.1} parent=11 // pred_check_branch
        %164 = sbr.rel (%p162) target = $region16
      $region15: #{down_forward.1} parent=11 // pred_region
        _
      $region16: #{down_forward.1} parent=11 // pred_fallthru
        _
      // Predicated region
      $region17: #{down_forward.1} parent=11 // pred_check
        %p165 = pneg %p79
      $region18: #{down_forward.1} parent=11 // pred_check_branch
        %167 = sbr.rel (%p165) target = $region20
      $region19: #{down_forward.1} parent=11 // pred_region
        _
      $region20: #{down_forward.1} parent=11 // pred_fallthru
        _
      // Predicated region
      $region21: #{down_forward.1} parent=11 // pred_check
        %p168 = pneg %p100
      $region22: #{down_forward.1} parent=11 // pred_check_branch
        %170 = sbr.rel (%p168) target = $region24
      $region23: #{down_forward.1} parent=11 // pred_region
        _
      $region24: #{down_forward.1} parent=11 // pred_fallthru
        _
      // Predicated region
      $region25: #{down_forward.1} parent=11 // pred_check
        %p171 = pneg %p121
      $region26: #{down_forward.1} parent=11 // pred_check_branch
        %173 = sbr.rel (%p171) target = $region28
      $region27: #{down_forward.1} parent=11 // pred_region
        _
      $region28: #{down_forward.1} parent=11 // pred_fallthru
        _
    $region12: #{down_forward.1} parent=5 // pred_fallthru
      _
    %p174 = scmp.lt.s32.totalorder %s11, 2
    // Predicated region
    $region29: #{down_forward.1} parent=5 // pred_check
      %p175 = pneg %p174
    $region30: #{down_forward.1} parent=5 // pred_check_branch
      %177 = sbr.rel (%p175) target = $region32
    $region31: #{down_forward.1} parent=5 // pred_region
      // Predicated region
      $region33: #{down_forward.1} parent=31 // pred_check
        %p178 = pneg %p31
      $region34: #{down_forward.1} parent=31 // pred_check_branch
        %180 = sbr.rel (%p178) target = $region36
      $region35: #{down_forward.1} parent=31 // pred_region
        %p181 = scmp.lt.s32.totalorder %s11, 1
        %s182 = scalar_select %p181, %s11, 1
        %s183 = smul.addr %s182, 2
        %s184 = smul.addr %s183, 8
        %s185 = scalar_lea.vmem %s0, %s184
      $region36: #{down_forward.1} parent=31 // pred_fallthru
        _
    $region32: #{down_forward.1} parent=5 // pred_fallthru
      _
    %p186 = scmp.le.s32.totalorder 1, %s11
    %p187 = scmp.lt.s32.totalorder %s11, 3
    %p188 = pnand %p186, %p187
    %p189 = pneg %p188
    // Predicated region
    $region37: #{down_forward.1} parent=5 // pred_check
      _
    $region38: #{down_forward.1} parent=5 // pred_check_branch
      %191 = sbr.rel (%p188) target = $region40
    $region39: #{down_forward.1} parent=5 // pred_region
      %s192 = ssub.s32 %s11, 1
      %p193 = scmp.lt.s32.totalorder %s16, 1
      %s194 = scalar_select %p193, %s16, 1
      %s195 = smul.addr %s194, 2
      %s196 = smul.addr %s195, 8
      %s197 = scalar_lea.vmem %s0, %s196
      %p198 = pneg %p37
      %p199 = pneg %p34
      %p200 = pneg %p58
      %p201 = pneg %p55
      %p202 = pneg %p79
      %p203 = pneg %p76
      %p204 = pneg %p100
      %p205 = pneg %p97
      %p206 = pneg %p121
      %p207 = pneg %p118
      %p208 = pneg %p147
      %p209 = pneg %p144
      %p210 = scmp.lt.s32.totalorder %s16, 1
      %s211 = scalar_select %p210, %s16, 1
      %s212 = smul.addr %s211, 8
      %s213 = scalar_lea.vmem %s5, %s212
      %p214 = scmp.lt.s32.totalorder %s16, 1
      %s215 = scalar_select %p214, %s16, 1
      %s216 = smul.addr %s215, 2
      %s217 = smul.addr %s216, 8
      %s218 = scalar_lea.vmem %s0, %s217
      %p219 = scmp.lt.s32.totalorder %s16, 1
      %s220 = scalar_select %p219, %s16, 1
      %s221 = smul.addr %s220, 8
      %s222 = scalar_lea.vmem %s5, %s221
      %v224 = vld [vmem:[%s218] sm:$0xff]
      %v225 = vld [vmem:[%s218 + $0x8] sm:$0xff]
      %v226 = vmax.f32 %v224, %v225
      %v227 = vpack.c.bf16 %v226, %v226
      %v229 = vshrl.u32 %v227, 16
      %v231 = vrot.slane %v229, 7
      %v232 = vshll.u32 %v227, 16
      %v234 = vor.u32 %v231, %v232
      %vm236 = vcmask 1040384
      %vm237 = vsmask.f32 256
      %vm238 = vmand %vm236, %vm237
      %v239 = vsel %vm238, 0, %v234
      %v240 = vrot.slane %v232, 1
      %v241 = vor.u32 %v229, %v240
      %vm243 = vcmask 1043456
      %vm244 = vsmask.f32 3328
      %vm245 = vmand %vm243, %vm244
      %v246 = vsel %vm245, %v241, 0
      %248 = vrot.lane.b32.xlu0 %v227, 64
      %v249 = vpop.permute.xlu0 %248
      %vm250 = vcmask 523264
      %v253 = vsel %vm250, %v239, %v249
      %v255 = vld [vmem:[%s1] sm:$0xf]
      %v256 = vld [vmem:[%s1 + $0x4] sm:$0xf]
      %v257 = vld [vmem:[%s1 + $0x8] sm:$0xf]
      %v258 = vld [vmem:[%s1 + $0xc] sm:$0xf]
      %v259 = vld [vmem:[%s1 + $0x10] sm:$0xf]
      %v260 = vld [vmem:[%s1 + $0x14] sm:$0xf]
      %v261 = vld [vmem:[%s1 + $0x18] sm:$0xf]
      %v262 = vld [vmem:[%s1 + $0x1c] sm:$0xf]
      %v263 = vld [vmem:[%s1 + $0x20] sm:$0xf]
      %v264 = vld [vmem:[%s1 + $0x24] sm:$0xf]
      %v265 = vld [vmem:[%s1 + $0x28] sm:$0xf]
      %v266 = vld [vmem:[%s1 + $0x2c] sm:$0xf]
      %v267 = vld [vmem:[%s1 + $0x30] sm:$0xf]
      %v268 = vld [vmem:[%s1 + $0x34] sm:$0xf]
      %v269 = vld [vmem:[%s1 + $0x38] sm:$0xf]
      %v270 = vld [vmem:[%s1 + $0x3c] sm:$0xf]
      %v271 = vld [vmem:[%s1 + $0x40] sm:$0xf]
      %v272 = vld [vmem:[%s1 + $0x44] sm:$0xf]
      %v273 = vld [vmem:[%s1 + $0x48] sm:$0xf]
      %v274 = vld [vmem:[%s1 + $0x4c] sm:$0xf]
      %v275 = vld [vmem:[%s1 + $0x50] sm:$0xf]
      %v276 = vld [vmem:[%s1 + $0x54] sm:$0xf]
      %v277 = vld [vmem:[%s1 + $0x58] sm:$0xf]
      %v278 = vld [vmem:[%s1 + $0x5c] sm:$0xf]
      %v279 = vld [vmem:[%s2] sm:$0x1]
      %v281 = vlaneseq
      %v282 = vshrl.u32 %v281, 7
      %v283 = vsub.s32 0, %v282
      %v284 = vrot.slane %v279, %v283
      %v310 = vunpack.c.l.b16 %v255
      %v311 = vunpack.c.l.b16 %v256
      %v312 = vunpack.c.l.b16 %v257
      %v313 = vunpack.c.l.b16 %v258
      %v314 = vunpack.c.l.b16 %v259
      %v315 = vunpack.c.l.b16 %v260
      %v316 = vunpack.c.l.b16 %v261
      %v317 = vunpack.c.l.b16 %v262
      %v318 = vunpack.c.l.b16 %v263
      %v319 = vunpack.c.l.b16 %v264
      %v320 = vunpack.c.l.b16 %v265
      %v321 = vunpack.c.l.b16 %v266
      %v322 = vunpack.c.l.b16 %v267
      %v323 = vunpack.c.l.b16 %v268
      %v324 = vunpack.c.l.b16 %v269
      %v325 = vunpack.c.l.b16 %v270
      %v326 = vunpack.c.l.b16 %v271
      %v327 = vunpack.c.l.b16 %v272
      %v328 = vunpack.c.l.b16 %v273
      %v329 = vunpack.c.l.b16 %v274
      %v330 = vunpack.c.l.b16 %v275
      %v331 = vunpack.c.l.b16 %v276
      %v332 = vunpack.c.l.b16 %v277
      %v333 = vunpack.c.l.b16 %v278
      %v334 = vpack.c.b16 %v311, %v310
      %v335 = vpack.c.b16 %v313, %v312
      %v336 = vpack.c.b16 %v315, %v314
      %v337 = vpack.c.b16 %v317, %v316
      %v338 = vpack.c.b16 %v319, %v318
      %v339 = vpack.c.b16 %v321, %v320
      %v340 = vpack.c.b16 %v323, %v322
      %v341 = vpack.c.b16 %v325, %v324
      %v342 = vpack.c.b16 %v327, %v326
      %v343 = vpack.c.b16 %v329, %v328
      %v344 = vpack.c.b16 %v331, %v330
      %v345 = vpack.c.b16 %v333, %v332
      %v359 = vsel %vm250, %v246, 0
      %361 = vmatprep.subr.bf16.mxu0 0
      %362 = vmatpush1.bf16.msra.mxu0 %v334
      %363 = vmatprep.subr.bf16.mxu0 0
      %364 = vmatpush1.bf16.msra.mxu0 %v335
      %365 = vmatprep.subr.bf16.mxu0 0
      %366 = vmatpush1.bf16.msra.mxu0 %v336
      %367 = vmatprep.subr.bf16.mxu0 0
      %368 = vmatpush1.bf16.msra.mxu0 %v337
      %369 = vmatprep.subr.bf16.mxu0 0
      %370 = vmatpush1.bf16.msra.mxu0 %v338
      %371 = vmatprep.subr.bf16.mxu0 0
      %372 = vmatpush1.bf16.msra.mxu0 %v339
      %373 = vmatprep.subr.bf16.mxu0 0
      %374 = vmatpush1.bf16.msra.mxu0 %v340
      %375 = vmatprep.subr.bf16.mxu0 0
      %376 = vmatpush1.bf16.msra.mxu0 %v341
      %377 = vmatprep.subr.bf16.mxu0 0
      %378 = vmatpush1.bf16.msra.mxu0 %v342
      %379 = vmatprep.subr.bf16.mxu0 0
      %380 = vmatpush1.bf16.msra.mxu0 %v343
      %381 = vmatprep.subr.bf16.mxu0 0
      %382 = vmatpush1.bf16.msra.mxu0 %v344
      %383 = vmatprep.subr.bf16.mxu0 0
      %384 = vmatpush1.bf16.msra.mxu0 %v345
      %385 = vmatprep.subr.bf16.mxu0 0
      %386 = vmatpush1.bf16.msra.mxu0 0
      %387 = vmatprep.subr.bf16.mxu0 0
      %388 = vmatpush1.bf16.msra.mxu0 0
      %389 = vmatprep.subr.bf16.mxu0 0
      %390 = vmatpush1.bf16.msra.mxu0 0
      %391 = vmatprep.subr.bf16.mxu0 0
      %392 = vmatpush1.bf16.msra.mxu0 0
      %393 = vmatprep.mubr.bf16.mxu0 %v359
      %394 = vmatmul.mubr.bf16.gmra.mrb[0].mxu0 %v253
      %v395 = vpop.f32.mrb[0].mxu0
      %v396 = vadd.f32 %v284, %v395
      %v397 = vpop.f32.mrb[0].mxu0
      %v398 = vpop.f32.mrb[0].mxu0
      %v399 = vpop.f32.mrb[0].mxu0
      %400 = vdwg.mxu0
      %v401 = vmax.f32 %v396, 0.0
      %v402 = vpack.c.bf16 %v401, %v401
      %v404 = vshrl.u32 %v402, 16
      %v406 = vrot.slane %v404, 7
      %v407 = vshll.u32 %v402, 16
      %v409 = vor.u32 %v406, %v407
      %v411 = vsel %vm238, 0, %v409
      %v412 = vrot.slane %v407, 1
      %v413 = vor.u32 %v404, %v412
      %v415 = vsel %vm245, %v413, 0
      %v416 = vld [vmem:[%s3] sm:$0xf]
      %v417 = vld [vmem:[%s3 + $0x4] sm:$0xf]
      %v418 = vld [vmem:[%s3 + $0x8] sm:$0xf]
      %v419 = vld [vmem:[%s3 + $0xc] sm:$0xf]
      %v420 = vld [vmem:[%s3 + $0x10] sm:$0xf]
      %v421 = vld [vmem:[%s3 + $0x14] sm:$0xf]
      %v422 = vld [vmem:[%s3 + $0x18] sm:$0xf]
      %v423 = vld [vmem:[%s3 + $0x1c] sm:$0xf]
      %v424 = vld [vmem:[%s3 + $0x20] sm:$0xf]
      %v425 = vld [vmem:[%s3 + $0x24] sm:$0xf]
      %v426 = vld [vmem:[%s3 + $0x28] sm:$0xf]
      %v427 = vld [vmem:[%s3 + $0x2c] sm:$0xf]
      %v428 = vld [vmem:[%s3 + $0x30] sm:$0xf]
      %v429 = vld [vmem:[%s3 + $0x34] sm:$0xf]
      %v430 = vld [vmem:[%s3 + $0x38] sm:$0xf]
      %v431 = vld [vmem:[%s3 + $0x3c] sm:$0xf]
      %v432 = vld [vmem:[%s3 + $0x40] sm:$0xf]
      %v433 = vld [vmem:[%s3 + $0x44] sm:$0xf]
      %v434 = vld [vmem:[%s3 + $0x48] sm:$0xf]
      %v435 = vld [vmem:[%s3 + $0x4c] sm:$0xf]
      %v436 = vld [vmem:[%s3 + $0x50] sm:$0xf]
      %v437 = vld [vmem:[%s3 + $0x54] sm:$0xf]
      %v438 = vld [vmem:[%s3 + $0x58] sm:$0xf]
      %v439 = vld [vmem:[%s3 + $0x5c] sm:$0xf]
      %v440 = vld [vmem:[%s3 + $0x60] sm:$0xf]
      %v441 = vld [vmem:[%s3 + $0x64] sm:$0xf]
      %v442 = vld [vmem:[%s3 + $0x68] sm:$0xf]
      %v443 = vld [vmem:[%s3 + $0x6c] sm:$0xf]
      %v444 = vld [vmem:[%s3 + $0x70] sm:$0xf]
      %v445 = vld [vmem:[%s3 + $0x74] sm:$0xf]
      %v446 = vld [vmem:[%s3 + $0x78] sm:$0xf]
      %v447 = vld [vmem:[%s3 + $0x7c] sm:$0xf]
      %v448 = vld [vmem:[%s3 + $0x80] sm:$0xf]
      %v449 = vld [vmem:[%s3 + $0x84] sm:$0xf]
      %v450 = vld [vmem:[%s3 + $0x88] sm:$0xf]
      %v451 = vld [vmem:[%s3 + $0x8c] sm:$0xf]
      %v452 = vld [vmem:[%s3 + $0x90] sm:$0xf]
      %v453 = vld [vmem:[%s3 + $0x94] sm:$0xf]
      %v454 = vld [vmem:[%s3 + $0x98] sm:$0xf]
      %v455 = vld [vmem:[%s3 + $0x9c] sm:$0xf]
      %v456 = vld [vmem:[%s3 + $0xa0] sm:$0xf]
      %v457 = vld [vmem:[%s3 + $0xa4] sm:$0xf]
      %v458 = vld [vmem:[%s3 + $0xa8] sm:$0xf]
      %v459 = vld [vmem:[%s3 + $0xac] sm:$0xf]
      %v460 = vld [vmem:[%s3 + $0xb0] sm:$0xf]
      %v461 = vld [vmem:[%s3 + $0xb4] sm:$0xf]
      %v462 = vld [vmem:[%s3 + $0xb8] sm:$0xf]
      %v463 = vld [vmem:[%s3 + $0xbc] sm:$0xf]
      %v464 = vld [vmem:[%s4] sm:$0x1]
      %v466 = vlaneseq
      %v467 = vshrl.u32 %v466, 7
      %v468 = vsub.s32 0, %v467
      %v469 = vrot.slane %v464, %v468
      %v519 = vunpack.c.l.b16 %v416
      %v520 = vunpack.c.l.b16 %v417
      %v521 = vunpack.c.l.b16 %v418
      %v522 = vunpack.c.l.b16 %v419
      %v523 = vunpack.c.l.b16 %v420
      %v524 = vunpack.c.l.b16 %v421
      %v525 = vunpack.c.l.b16 %v422
      %v526 = vunpack.c.l.b16 %v423
      %v527 = vunpack.c.l.b16 %v424
      %v528 = vunpack.c.l.b16 %v425
      %v529 = vunpack.c.l.b16 %v426
      %v530 = vunpack.c.l.b16 %v427
      %v531 = vunpack.c.l.b16 %v428
      %v532 = vunpack.c.l.b16 %v429
      %v533 = vunpack.c.l.b16 %v430
      %v534 = vunpack.c.l.b16 %v431
      %v535 = vunpack.c.l.b16 %v432
      %v536 = vunpack.c.l.b16 %v433
      %v537 = vunpack.c.l.b16 %v434
      %v538 = vunpack.c.l.b16 %v435
      %v539 = vunpack.c.l.b16 %v436
      %v540 = vunpack.c.l.b16 %v437
      %v541 = vunpack.c.l.b16 %v438
      %v542 = vunpack.c.l.b16 %v439
      %v543 = vunpack.c.l.b16 %v440
      %v544 = vunpack.c.l.b16 %v441
      %v545 = vunpack.c.l.b16 %v442
      %v546 = vunpack.c.l.b16 %v443
      %v547 = vunpack.c.l.b16 %v444
      %v548 = vunpack.c.l.b16 %v445
      %v549 = vunpack.c.l.b16 %v446
      %v550 = vunpack.c.l.b16 %v447
      %v551 = vunpack.c.l.b16 %v448
      %v552 = vunpack.c.l.b16 %v449
      %v553 = vunpack.c.l.b16 %v450
      %v554 = vunpack.c.l.b16 %v451
      %v555 = vunpack.c.l.b16 %v452
      %v556 = vunpack.c.l.b16 %v453
      %v557 = vunpack.c.l.b16 %v454
      %v558 = vunpack.c.l.b16 %v455
      %v559 = vunpack.c.l.b16 %v456
      %v560 = vunpack.c.l.b16 %v457
      %v561 = vunpack.c.l.b16 %v458
      %v562 = vunpack.c.l.b16 %v459
      %v563 = vunpack.c.l.b16 %v460
      %v564 = vunpack.c.l.b16 %v461
      %v565 = vunpack.c.l.b16 %v462
      %v566 = vunpack.c.l.b16 %v463
      %v567 = vpack.c.b16 %v520, %v519
      %v568 = vpack.c.b16 %v522, %v521
      %v569 = vpack.c.b16 %v524, %v523
      %v570 = vpack.c.b16 %v526, %v525
      %v571 = vpack.c.b16 %v528, %v527
      %v572 = vpack.c.b16 %v530, %v529
      %v573 = vpack.c.b16 %v532, %v531
      %v574 = vpack.c.b16 %v534, %v533
      %v575 = vpack.c.b16 %v536, %v535
      %v576 = vpack.c.b16 %v538, %v537
      %v577 = vpack.c.b16 %v540, %v539
      %v578 = vpack.c.b16 %v542, %v541
      %v579 = vpack.c.b16 %v544, %v543
      %v580 = vpack.c.b16 %v546, %v545
      %v581 = vpack.c.b16 %v548, %v547
      %v582 = vpack.c.b16 %v550, %v549
      %v583 = vpack.c.b16 %v552, %v551
      %v584 = vpack.c.b16 %v554, %v553
      %v585 = vpack.c.b16 %v556, %v555
      %v586 = vpack.c.b16 %v558, %v557
      %v587 = vpack.c.b16 %v560, %v559
      %v588 = vpack.c.b16 %v562, %v561
      %v589 = vpack.c.b16 %v564, %v563
      %v590 = vpack.c.b16 %v566, %v565
      %615 = vmatprep.subr.bf16.mxu0 0
      %616 = vmatpush1.bf16.msra.mxu0 %v567
      %617 = vmatprep.subr.bf16.mxu0 0
      %618 = vmatpush1.bf16.msra.mxu0 %v568
      %619 = vmatprep.subr.bf16.mxu0 0
      %620 = vmatpush1.bf16.msra.mxu0 %v569
      %621 = vmatprep.subr.bf16.mxu0 0
      %622 = vmatpush1.bf16.msra.mxu0 %v570
      %623 = vmatprep.subr.bf16.mxu0 0
      %624 = vmatpush1.bf16.msra.mxu0 %v571
      %625 = vmatprep.subr.bf16.mxu0 0
      %626 = vmatpush1.bf16.msra.mxu0 %v572
      %627 = vmatprep.subr.bf16.mxu0 0
      %628 = vmatpush1.bf16.msra.mxu0 %v573
      %629 = vmatprep.subr.bf16.mxu0 0
      %630 = vmatpush1.bf16.msra.mxu0 %v574
      %631 = vmatprep.subr.bf16.mxu0 0
      %632 = vmatpush1.bf16.msra.mxu0 %v575
      %633 = vmatprep.subr.bf16.mxu0 0
      %634 = vmatpush1.bf16.msra.mxu0 %v576
      %635 = vmatprep.subr.bf16.mxu0 0
      %636 = vmatpush1.bf16.msra.mxu0 %v577
      %637 = vmatprep.subr.bf16.mxu0 0
      %638 = vmatpush1.bf16.msra.mxu0 %v578
      %639 = vmatprep.subr.bf16.mxu0 0
      %640 = vmatpush1.bf16.msra.mxu0 %v579
      %641 = vmatprep.subr.bf16.mxu0 0
      %642 = vmatpush1.bf16.msra.mxu0 %v580
      %643 = vmatprep.subr.bf16.mxu0 0
      %644 = vmatpush1.bf16.msra.mxu0 %v581
      %645 = vmatprep.subr.bf16.mxu0 0
      %646 = vmatpush1.bf16.msra.mxu0 %v582
      %647 = vmatprep.mubr.bf16.mxu0 %v402
      %648 = vmatmul.mubr.bf16.gmra.mrb[0].mxu0 %v411
      %v649 = vpop.f32.mrb[0].mxu0
      %v650 = vadd.f32 %v469, %v649
      %v651 = vpop.f32.mrb[0].mxu0
      %v652 = vpop.f32.mrb[0].mxu0
      %v653 = vpop.f32.mrb[0].mxu0
      %654 = vdwg.mxu0
      %655 = vmatprep.subr.bf16.mxu0 0
      %656 = vmatpush1.bf16.msra.mxu0 %v583
      %657 = vmatprep.subr.bf16.mxu0 0
      %658 = vmatpush1.bf16.msra.mxu0 %v584
      %659 = vmatprep.subr.bf16.mxu0 0
      %660 = vmatpush1.bf16.msra.mxu0 %v585
      %661 = vmatprep.subr.bf16.mxu0 0
      %662 = vmatpush1.bf16.msra.mxu0 %v586
      %663 = vmatprep.subr.bf16.mxu0 0
      %664 = vmatpush1.bf16.msra.mxu0 %v587
      %665 = vmatprep.subr.bf16.mxu0 0
      %666 = vmatpush1.bf16.msra.mxu0 %v588
      %667 = vmatprep.subr.bf16.mxu0 0
      %668 = vmatpush1.bf16.msra.mxu0 %v589
      %669 = vmatprep.subr.bf16.mxu0 0
      %670 = vmatpush1.bf16.msra.mxu0 %v590
      %671 = vmatprep.subr.bf16.mxu0 0
      %672 = vmatpush1.bf16.msra.mxu0 0
      %673 = vmatprep.subr.bf16.mxu0 0
      %674 = vmatpush1.bf16.msra.mxu0 0
      %675 = vmatprep.subr.bf16.mxu0 0
      %676 = vmatpush1.bf16.msra.mxu0 0
      %677 = vmatprep.subr.bf16.mxu0 0
      %678 = vmatpush1.bf16.msra.mxu0 0
      %679 = vmatprep.subr.bf16.mxu0 0
      %680 = vmatpush1.bf16.msra.mxu0 0
      %681 = vmatprep.subr.bf16.mxu0 0
      %682 = vmatpush1.bf16.msra.mxu0 0
      %683 = vmatprep.subr.bf16.mxu0 0
      %684 = vmatpush1.bf16.msra.mxu0 0
      %685 = vmatprep.subr.bf16.mxu0 0
      %686 = vmatpush1.bf16.msra.mxu0 0
      %687 = vmatprep.mubr.bf16.mxu0 0
      %688 = vmatmul.mubr.bf16.gmra.mrb[0].mxu0 %v415
      %v689 = vpop.f32.mrb[0].mxu0
      %v690 = vadd.f32 %v650, %v689
      %v691 = vpop.f32.mrb[0].mxu0
      %v692 = vpop.f32.mrb[0].mxu0
      %v693 = vpop.f32.mrb[0].mxu0
      %694 = vdwg.mxu0
      %v695 = vmax.f32 %v690, 0.0
      %696 = vst [vmem:[%s222] sm:$0xff] %v695
      %p697 = scmp.lt.s32.totalorder %s16, 1
      %s698 = scalar_select %p697, %s16, 1
      %s699 = smul.addr %s698, 8
      %s700 = scalar_lea.vmem %s5, %s699
      // Predicated region
      $region41: #{down_forward.1} parent=39 // pred_check
        %p701 = pneg %p144
      $region42: #{down_forward.1} parent=39 // pred_check_branch
        %703 = sbr.rel (%p701) target = $region44
      $region43: #{down_forward.1} parent=39 // pred_region
        _
      $region44: #{down_forward.1} parent=39 // pred_fallthru
        _
    $region40: #{down_forward.1} parent=5 // pred_fallthru
      _
    %p704 = scmp.le.s32.totalorder 2, %s11
    // Predicated region
    $region45: #{down_forward.1} parent=5 // pred_check
      %p705 = pneg %p704
    $region46: #{down_forward.1} parent=5 // pred_check_branch
      %707 = sbr.rel (%p705) target = $region48
    $region47: #{down_forward.1} parent=5 // pred_region
      %s708 = ssub.s32 %s11, 2
      // Predicated region
      $region49: #{down_forward.1} parent=47 // pred_check
        %p709 = pneg %p150
      $region50: #{down_forward.1} parent=47 // pred_check_branch
        %711 = sbr.rel (%p709) target = $region52
      $region51: #{down_forward.1} parent=47 // pred_region
        %p712 = scmp.lt.s32.totalorder %s17, 1
        %s713 = scalar_select %p712, %s17, 1
        %s714 = smul.addr %s713, 8
        %s715 = scalar_lea.vmem %s5, %s714
      $region52: #{down_forward.1} parent=47 // pred_fallthru
        _
    $region48: #{down_forward.1} parent=5 // pred_fallthru
      _
  $region6: #{down_forward.1} parent=0 // loop_footer
    %s15 = sadd.s32 1, %s11
  $region7: #{down_forward.1} parent=0 // loop_footer_branch
    %10 = sbr.rel target = $region3
  $region8: #{down_forward.1} parent=0 // loop_exit
    _

</llo_original>
